<compile_context>
chip_gen: v6e
topology: v6e:2x2x1
jax: 0.10.0
libtpu: 0.0.40
codegen_flags: <defaults>
</compile_context>

<pallas_src>
import math

import jax
import jax.numpy as jnp
from jax.experimental import pallas as pl
from jax.experimental.pallas import tpu as pltpu


def _drop_path_kernel(x_ref, scale_ref, o_ref):
    # x_ref: (tb, tf) activation tile; scale_ref: (tb, 1) per-sample scale (0 or 1/keep_prob).
    # Pure VPU broadcast-multiply; memory bound.
    o_ref[...] = x_ref[...] * scale_ref[...]


def _round_up(n, m):
    return ((n + m - 1) // m) * m


def _vmem_capacity_bytes():
    # Generation-aware VMEM cap (v7x: 64 MiB/TC, v5e/v6e: 128 MiB).  Fall back to the most
    # conservative value if the query is unavailable.
    try:
        return int(pltpu.get_tpu_info().vmem_capacity_bytes)
    except Exception:
        return 64 * 1024 * 1024


def _pick_tiles(b, f, itemsize, vmem_cap):
    """Pick lane/sublane-aligned (tb, tf).

    - sublane unit is dtype-aware (8 for 4B, 16 for 2B, 32 for 1B packed dtypes),
    - the per-tile byte budget is derived from VMEM capacity (4 double-buffered big tiles
      must fit), capped at 8 MiB/tile (past the knee of the step-overhead curve),
    - non-aligned dims get a capped tile + one masked remainder block instead of a
      full-extent (possibly multi-10s-of-MiB) block.
    """
    sub_unit = {4: 8, 2: 16, 1: 32}.get(itemsize, 8)
    lane_unit = 128
    b_pad = _round_up(b, sub_unit)
    f_pad = _round_up(f, lane_unit)

    total_budget = (vmem_cap * 6) // 10                    # leave headroom in scoped VMEM
    tile_budget = max(512 * 1024, min(8 * 1024 * 1024, total_budget // 4))

    tb = min(b_pad, 256)                                   # 256 is a multiple of 8/16/32
    tf_max = max(lane_unit, (tile_budget // (tb * itemsize)) // lane_unit * lane_unit)
    tf = min(f_pad, tf_max)

    # Prefer a tf that divides the padded feature extent (avoids a tiny remainder block),
    # but only if it does not shrink the tile by more than 2x.
    if tf < f_pad:
        t = tf
        while t > lane_unit and f_pad % t != 0:
            t -= lane_unit
        if f_pad % t == 0 and t >= max(lane_unit, tf // 2):
            tf = t

    # v7x megacore: keep >=2 grid programs so both TensorCores' DMA engines stream
    # (neutral on single-core v5e/v6e).  Prefer splitting the (larger) feature axis.
    if pl.cdiv(b, tb) * pl.cdiv(f, tf) == 1:
        if f_pad >= 2 * lane_unit:
            tf = _round_up(f_pad // 2, lane_unit)
        elif b_pad >= 2 * sub_unit:
            tb = _round_up(b_pad // 2, sub_unit)

    return tb, tf


def drop_path(x, drop_prob, *, training=False, key=None, donate_x=False):
    """Stochastic depth; matches torch drop_path(x, drop_prob, training)."""
    if drop_prob is None or drop_prob == 0.0 or not training:
        return x                      # identity path, same as PyTorch
    if key is None:
        raise ValueError("drop_path with training=True and drop_prob > 0 requires a PRNG key")

    keep_prob = 1.0 - float(drop_prob)
    b = x.shape[0]
    f = int(math.prod(x.shape[1:]))
    x2d = x.reshape(b, f)

    # Per-sample binary mask (torch formula: floor(keep_prob + U[0,1))), folded together with
    # the 1/keep_prob rescale into a single per-sample factor.
    u = jax.random.uniform(key, (b, 1), dtype=jnp.float32)
    scale = (jnp.floor(keep_prob + u) / keep_prob).astype(x.dtype)

    itemsize = jnp.dtype(x.dtype).itemsize
    vmem_cap = _vmem_capacity_bytes()
    tb, tf = _pick_tiles(b, f, itemsize, vmem_cap)

    # Batch outer, feature inner: the scale block index (i, 0) is constant along the inner
    # axis, so the pipeline never re-DMAs the broadcast scale tile.  Do not swap these axes.
    grid = (pl.cdiv(b, tb), pl.cdiv(f, tf))

    # double-buffered x tile + double-buffered out tile
    # + 2 lane-padded (tb, 128) scale buffers + slack
    vmem_need = 4 * tb * tf * itemsize + 2 * tb * 128 * 4 + (2 << 20)
    vmem_limit = max(16 * 1024 * 1024, min(int(vmem_need), vmem_cap))

    extra = {}
    if donate_x:
        extra["input_output_aliases"] = {0: 0}   # reuse the x2d buffer for the output

    out = pl.pallas_call(
        _drop_path_kernel,
        out_shape=jax.ShapeDtypeStruct((b, f), x.dtype),
        grid_spec=pltpu.PrefetchScalarGridSpec(
            num_scalar_prefetch=0,
            grid=grid,
            in_specs=[
                pl.BlockSpec((tb, tf), lambda i, j: (i, j)),   # x tile (lane-dense)
                pl.BlockSpec((tb, 1), lambda i, j: (i, 0)),    # per-sample scale (broadcast)
            ],
            out_specs=pl.BlockSpec((tb, tf), lambda i, j: (i, j)),
        ),
        compiler_params=pltpu.CompilerParams(
            dimension_semantics=("parallel", "parallel"),
            vmem_limit_bytes=vmem_limit,
        ),
        cost_estimate=pl.CostEstimate(
            flops=b * f,
            transcendentals=0,
            bytes_accessed=2 * b * f * itemsize + b * itemsize,
        ),
        **extra,
    )(x2d, scale)

    return out.reshape(x.shape)


class DropPath:
    """Thin functional mirror of the PyTorch nn.Module."""

    def __init__(self, drop_prob=None):
        self.drop_prob = drop_prob
        self.training = True

    def __call__(self, x, *, key=None):
        return drop_path(x, self.drop_prob, training=self.training, key=key)


if __name__ == "__main__":
    root = jax.random.PRNGKey(0)
    kx, kmask, kx2, kmask2 = jax.random.split(root, 4)

    drop_prob = 0.25
    keep_prob = 1.0 - drop_prob

    # ---- aligned case: batch=8, seq=8, dim=128 (F = 1024) -------------------------------
    batch, seq, dim = 8, 8, 128
    x = jax.random.normal(kx, (batch, seq, dim), jnp.float32)

    mod = DropPath(drop_prob)
    out = jax.block_until_ready(mod(x, key=kmask))

    # Pure-JAX reference (same mask formula and key as the wrapper -> exact match).
    u = jax.random.uniform(kmask, (batch, 1), dtype=jnp.float32)
    scale_ref = (jnp.floor(keep_prob + u) / keep_prob).reshape(batch, 1, 1)
    ref = x * scale_ref               # == x.div(keep_prob) * mask
    assert out.shape == x.shape and out.dtype == x.dtype
    assert jnp.allclose(out, ref, atol=1e-6, rtol=1e-6), "mismatch vs reference"

    # Property check: every sample is either fully dropped (zeros) or rescaled by 1/keep_prob.
    per_sample_zero = jnp.all(out.reshape(batch, -1) == 0.0, axis=1)
    per_sample_kept = jnp.all(jnp.isclose(out, x / keep_prob, atol=1e-6), axis=(1, 2))
    assert bool(jnp.all(per_sample_zero | per_sample_kept))

    # ---- non-aligned case (odd batch, F not a multiple of 128) --------------------------
    # Exercises the capped-tile + masked remainder-block path.
    b2, s2, d2 = 6, 7, 45             # F = 315
    x2 = jax.random.normal(kx2, (b2, s2, d2), jnp.float32)
    out2 = jax.block_until_ready(drop_path(x2, drop_prob, training=True, key=kmask2))
    u2 = jax.random.uniform(kmask2, (b2, 1), dtype=jnp.float32)
    scale2 = (jnp.floor(keep_prob + u2) / keep_prob).reshape(b2, 1, 1)
    assert out2.shape == x2.shape and out2.dtype == x2.dtype
    assert jnp.allclose(out2, x2 * scale2, atol=1e-6, rtol=1e-6), "mismatch (ragged case)"

    # ---- eval mode (and drop_prob == 0) is identity, like the PyTorch module ------------
    mod.training = False
    out_eval = mod(x)
    assert out_eval is x

    print("KERNEL_OK")
</pallas_src>

<mosaic_0001>
module attributes {stable_mosaic.version = 11 : i64} {
  func.func @_drop_path_kernel(%arg0: i32, %arg1: i32, %arg2: memref<8x512xf32, #tpu.memory_space<vmem>>, %arg3: memref<8x1xf32, #tpu.memory_space<vmem>>, %arg4: memref<8x512xf32, #tpu.memory_space<vmem>>) attributes {dimension_semantics = [#tpu.dimension_semantics<parallel>, #tpu.dimension_semantics<parallel>], iteration_bounds = array<i64: 1, 2>, scalar_prefetch = 0 : i64, scratch_operands = 0 : i64, tpu.core_type = #tpu.core_type<tc>, window_params = [{transform_indices = @transform_0, window_bounds = array<i64: 8, 512>}, {transform_indices = @transform_1, window_bounds = array<i64: 8, 1>}, {transform_indices = @transform_2, window_bounds = array<i64: 8, 512>}]} {
    %c0 = arith.constant 0 : index
    %c0_0 = arith.constant 0 : index
    %0 = vector.load %arg2[%c0, %c0_0] : memref<8x512xf32, #tpu.memory_space<vmem>>, vector<8x512xf32>
    %c0_1 = arith.constant 0 : index
    %c0_2 = arith.constant 0 : index
    %1 = vector.load %arg3[%c0_1, %c0_2] : memref<8x1xf32, #tpu.memory_space<vmem>>, vector<8x1xf32>
    %2 = vector.broadcast %1 : vector<8x1xf32> to vector<8x512xf32>
    %3 = arith.mulf %0, %2 : vector<8x512xf32>
    %c0_3 = arith.constant 0 : index
    %c0_4 = arith.constant 0 : index
    %4 = vector.load %arg4[%c0_3, %c0_4] : memref<8x512xf32, #tpu.memory_space<vmem>>, vector<8x512xf32>
    tpu.vector_store %arg4[%c0_3, %c0_4], %3 {strides = array<i32>} : memref<8x512xf32, #tpu.memory_space<vmem>>, vector<8x512xf32>,
    return
  }
  func.func @transform_0(%arg0: i32, %arg1: i32) -> (i32, i32) {
    %c0_i32 = arith.constant 0 : i32
    return %arg0, %arg1 : i32, i32
  }
  func.func @transform_1(%arg0: i32, %arg1: i32) -> (i32, i32) {
    %c0_i32 = arith.constant 0 : i32
    %c0_i32_0 = arith.constant 0 : i32
    return %arg0, %c0_i32 : i32, i32
  }
  func.func @transform_2(%arg0: i32, %arg1: i32) -> (i32, i32) {
    %c0_i32 = arith.constant 0 : i32
    return %arg0, %arg1 : i32, i32
  }
}

</mosaic_0001>

<llo_original>
// kernel: tpu_custom_call.1
$region0: #{tpu_custom_call.1}
  #allocation0 [shape = 'u32[]', space=smem, size = 0x4, offset = 0x4, fixed_abs, tag = 'smem constant byte address 0x4 - core index']
  #allocation1 [shape = 'u32[144,128]{1,0:T(1,128)}', space=vmem, size = 0x12000, scoped, tag = 'internal scratch']
  %s0 = inlined_call_operand.hbm [shape: f32[8,1024], index: 0, kind: input, shape index: {}]
  %s1 = inlined_call_operand.vmem [shape: f32[8,1], index: 1, kind: input, shape index: {}]
  %s2 = inlined_call_operand.hbm [shape: f32[8,1024], index: 2, kind: output, shape index: {}]
  %s3 = sld [smem:[#allocation0]]
  $region45: #{tpu_custom_call.1} parent=0
    _
  %s5 = ssub.s32 1, %s3
  %s6 = scalar_select 0, %s5, %s3
  $region1: #{tpu_custom_call.1} parent=0
    #allocation2 [shape = 'u8[32768]{0}', space=vmem, size = 0x8000, scoped, tag = 'input window, operand 0']
    #allocation3 [shape = 's32[2]{0}', space=sflag, size = 0x8, scoped, tag = 'scoped memory for tpu_custom_call.1']
    #allocation4 [shape = 's32[2]{0}', space=sflag, size = 0x8, scoped, tag = 'scoped memory for tpu_custom_call.1']
    #allocation5 [shape = 'u8[32768]{0}', space=vmem, size = 0x8000, scoped, tag = 'output window, operand 0']
    %7 = vsyncpa [#allocation3], 0
    %s8 = scalar_lea.sflag [#allocation3], 1
    %9 = vsyncpa %s8, 0
    %10 = vsyncpa [#allocation4], 0
    %s11 = scalar_lea.sflag [#allocation4], 1
    %12 = vsyncpa %s11, 0
    loop: start=0, step=1, limit=4
    $region2: #{tpu_custom_call.1} parent=1 // loop_pre_header
      _
    $region3: #{tpu_custom_call.1} parent=1 // loop_header
      %s14 = sphi 0, %s18
      %p15 = scmp.ge.s32.totalorder %s14, 4
      %s21 = sphi 0, %s33
      %s22 = sphi 0, %s29
      %s23 = sphi 0, %s21
      %s24 = sphi 0, %s22
      %s25 = sphi 0, %s23
      %s26 = sphi 0, %s24
      %s38 = sphi 0, %s40
      %s41 = sphi 0, %s38
      %s42 = sphi 0, %s41
      %s58 = sphi 0, %s42
      %s64 = sphi 0, %s66
      %s67 = sphi 0, %s64
      %s68 = sphi 0, %s67
      %s84 = sphi 0, %s68
      %s92 = sphi 0, %s94
      %s95 = sphi 0, %s92
      %s96 = sphi 0, %s95
      %s112 = sphi 0, %s96
    $region4: #{tpu_custom_call.1} parent=1 // loop_header_branch
      %17 = sbr.rel (%p15) target = $region8
    $region5: #{tpu_custom_call.1} parent=1 // loop_body
      %s19 = ssub.s32 %s14, 1
      %s20 = ssub.s32 %s14, 2
      %s27 = sadd.s32 1, %s22
      %p28 = scmp.ge.s32.totalorder %s27, 2
      %s29 = scalar_select %p28, 0, %s27
      %s30 = sadd.s32 1, %s21
      %s31 = scalar_select %p28, %s30, %s21
      %p32 = scmp.ge.s32.totalorder %s31, 1
      %s33 = scalar_select %p32, 0, %s31
      %s34 = ssub.s32 %s21, %s33
      %s35 = ssub.s32 %s22, %s29
      %s36 = sor.u32 %s34, %s35
      %p37 = scmp.eq.s32.totalorder %s36, 0
      %s39 = sadd.s32 %s38, 1
      %s40 = scalar_select %p37, %s38, %s39
      %p43 = pneg %p37
      %p44 = scmp.eq.s32.totalorder %s14, 1
      %p45 = por %p43, %p44
      %p46 = scmp.ne.s32.totalorder %s38, %s41
      %p47 = scmp.eq.s32.totalorder %s14, 0
      %p48 = por %p46, %p47
      %p49 = scmp.ne.s32.totalorder %s38, %s41
      %p50 = scmp.eq.s32.totalorder %s19, 1
      %p51 = por %p49, %p50
      %p52 = scmp.ne.s32.totalorder %s41, %s42
      %p53 = scmp.eq.s32.totalorder %s19, 0
      %p54 = por %p52, %p53
      %p55 = scmp.ne.s32.totalorder %s41, %s42
      %p56 = scmp.eq.s32.totalorder %s20, 1
      %p57 = por %p55, %p56
      %p59 = scmp.ne.s32.totalorder %s42, %s58
      %p60 = scmp.eq.s32.totalorder %s20, 0
      %p61 = por %p59, %p60
      %s62 = ssub.s32 %s21, %s33
      %p63 = scmp.eq.s32.totalorder %s62, 0
      %s65 = sadd.s32 %s64, 1
      %s66 = scalar_select %p63, %s64, %s65
      %p69 = pneg %p63
      %p70 = scmp.eq.s32.totalorder %s14, 1
      %p71 = por %p69, %p70
      %p72 = scmp.ne.s32.totalorder %s64, %s67
      %p73 = scmp.eq.s32.totalorder %s14, 0
      %p74 = por %p72, %p73
      %p75 = scmp.ne.s32.totalorder %s64, %s67
      %p76 = scmp.eq.s32.totalorder %s19, 1
      %p77 = por %p75, %p76
      %p78 = scmp.ne.s32.totalorder %s67, %s68
      %p79 = scmp.eq.s32.totalorder %s19, 0
      %p80 = por %p78, %p79
      %p81 = scmp.ne.s32.totalorder %s67, %s68
      %p82 = scmp.eq.s32.totalorder %s20, 1
      %p83 = por %p81, %p82
      %p85 = scmp.ne.s32.totalorder %s68, %s84
      %p86 = scmp.eq.s32.totalorder %s20, 0
      %p87 = por %p85, %p86
      %s88 = ssub.s32 %s21, %s33
      %s89 = ssub.s32 %s22, %s29
      %s90 = sor.u32 %s88, %s89
      %p91 = scmp.eq.s32.totalorder %s90, 0
      %s93 = sadd.s32 %s92, 1
      %s94 = scalar_select %p91, %s92, %s93
      %p97 = pneg %p91
      %p98 = scmp.eq.s32.totalorder %s14, 1
      %p99 = por %p97, %p98
      %p100 = scmp.ne.s32.totalorder %s92, %s95
      %p101 = scmp.eq.s32.totalorder %s14, 0
      %p102 = por %p100, %p101
      %p103 = scmp.ne.s32.totalorder %s92, %s95
      %p104 = scmp.eq.s32.totalorder %s19, 1
      %p105 = por %p103, %p104
      %p106 = scmp.ne.s32.totalorder %s95, %s96
      %p107 = scmp.eq.s32.totalorder %s19, 0
      %p108 = por %p106, %p107
      %p109 = scmp.ne.s32.totalorder %s95, %s96
      %p110 = scmp.eq.s32.totalorder %s20, 1
      %p111 = por %p109, %p110
      %p113 = scmp.ne.s32.totalorder %s96, %s112
      %p114 = scmp.eq.s32.totalorder %s20, 0
      %p115 = por %p113, %p114
      %p116 = scmp.le.s32.totalorder 1, %s14
      %p117 = scmp.lt.s32.totalorder %s14, 3
      %p118 = pnand %p116, %p117
      %p119 = pneg %p118
      // Predicated region
      $region9: #{tpu_custom_call.1} parent=5 // pred_check
        _
      $region10: #{tpu_custom_call.1} parent=5 // pred_check_branch
        %121 = sbr.rel (%p118) target = $region12
      $region11: #{tpu_custom_call.1} parent=5 // pred_region
        %s122 = ssub.s32 %s14, 1
        // Predicated region
        $region13: #{tpu_custom_call.1} parent=11 // pred_check
          %p123 = pneg %p80
        $region14: #{tpu_custom_call.1} parent=11 // pred_check_branch
          %125 = sbr.rel (%p123) target = $region16
        $region15: #{tpu_custom_call.1} parent=11 // pred_region
          %p126 = scmp.lt.s32.totalorder %s23, 0
          %s127 = scalar_select %p126, %s23, 0
          %s128 = smul.addr %s127, 8
          %s129 = scalar_lea.vmem %s1, %s128
        $region16: #{tpu_custom_call.1} parent=11 // pred_fallthru
          _
      $region12: #{tpu_custom_call.1} parent=5 // pred_fallthru
        _
      %p130 = scmp.lt.s32.totalorder %s14, 2
      // Predicated region
      $region17: #{tpu_custom_call.1} parent=5 // pred_check
        %p131 = pneg %p130
      $region18: #{tpu_custom_call.1} parent=5 // pred_check_branch
        %133 = sbr.rel (%p131) target = $region20
      $region19: #{tpu_custom_call.1} parent=5 // pred_region
        // Predicated region
        $region21: #{tpu_custom_call.1} parent=19 // pred_check
          %p134 = pneg %p48
        $region22: #{tpu_custom_call.1} parent=19 // pred_check_branch
          %136 = sbr.rel (%p134) target = $region24
        $region23: #{tpu_custom_call.1} parent=19 // pred_region
          %s137 = sand.u32 %s38, 1
          %s138 = scalar_lea.sflag [#allocation3], %s137
          %s139 = sand.u32 %s38, 1
          %s140 = smul.addr %s139, 32
          %s141 = scalar_lea.vmem [#allocation2], %s140
          %s142 = smul.u32 4, %s22
          %s144 = ssub.s32 512, 512
          %145 = vsyncadd %s138, %s144
          %s146 = smul.addr %s21, 8
          %s147 = sadd.s32 %s142, %s146
          %s148 = smul.addr %s147, 128
          %s149 = scalar_lea.hbm %s0, %s148
          %s151 = sshll.u32 %s141, 4
          %s152 = int_to_ptr.vmem [resolvable:$true] %s151
          %154 = dma.hbm_to_vmem [thread:$0]  %s149, 512, %s152, %s138
        $region24: #{tpu_custom_call.1} parent=19 // pred_fallthru
          _
      $region20: #{tpu_custom_call.1} parent=5 // pred_fallthru
        _
      %p155 = scmp.le.s32.totalorder 1, %s14
      %p156 = scmp.lt.s32.totalorder %s14, 3
      %p157 = pnand %p155, %p156
      %p158 = pneg %p157
      // Predicated region
      $region25: #{tpu_custom_call.1} parent=5 // pred_check
        _
      $region26: #{tpu_custom_call.1} parent=5 // pred_check_branch
        %160 = sbr.rel (%p157) target = $region28
      $region27: #{tpu_custom_call.1} parent=5 // pred_region
        %s161 = ssub.s32 %s14, 1
        %s162 = sand.u32 %s41, 1
        %s163 = scalar_lea.sflag [#allocation3], %s162
        %s164 = sand.u32 %s41, 1
        %s165 = smul.addr %s164, 32
        %s166 = scalar_lea.vmem [#allocation2], %s165
        // Predicated region
        $region29: #{tpu_custom_call.1} parent=27 // pred_check
          %p167 = pneg %p54
        $region30: #{tpu_custom_call.1} parent=27 // pred_check_branch
          %169 = sbr.rel (%p167) target = $region32
        $region31: #{tpu_custom_call.1} parent=27 // pred_region
          %170 = dma.done %s163, 512
        $region32: #{tpu_custom_call.1} parent=27 // pred_fallthru
          _
        %s171 = sand.u32 %s41, 1
        %s172 = scalar_lea.sflag [#allocation3], %s171
        %s173 = sand.u32 %s41, 1
        %s174 = smul.addr %s173, 32
        %s175 = scalar_lea.vmem [#allocation2], %s174
        %p176 = pneg %p54
        %p177 = pneg %p51
        %p178 = scmp.lt.s32.totalorder %s23, 0
        %s179 = scalar_select %p178, %s23, 0
        %s180 = smul.addr %s179, 8
        %s181 = scalar_lea.vmem %s1, %s180
        %p182 = pneg %p80
        %p183 = pneg %p77
        %p184 = pneg %p108
        %p185 = pneg %p105
        %s186 = sand.u32 %s95, 1
        %s187 = scalar_lea.sflag [#allocation4], %s186
        %s188 = sand.u32 %s95, 1
        %s189 = smul.addr %s188, 32
        %s190 = scalar_lea.vmem [#allocation5], %s189
        %s191 = smul.u32 4, %s24
        %p192 = scmp.lt.s32.totalorder %s23, 0
        %s193 = scalar_select %p192, %s23, 0
        %s194 = smul.addr %s193, 8
        %s195 = scalar_lea.vmem %s1, %s194
        %s196 = smul.u32 4, %s24
        %v197 = vld [vmem:[%s166] sm:$0xff]
        %v198 = vld [vmem:[%s166 + $0x8] sm:$0xff]
        %v199 = vld [vmem:[%s166 + $0x10] sm:$0xff]
        %v200 = vld [vmem:[%s166 + $0x18] sm:$0xff]
        %v201 = vld [vmem:[%s195] sm:$0xff]
        %203 = vset.pattern.permute.xlu0 0
        %204 = vperm.xlu0 %203, %v201
        %v205 = vpop.permute.xlu0 %204
        %v207 = vmul.f32 %v197, %v205
        %v208 = vmul.f32 %v198, %v205
        %v209 = vmul.f32 %v199, %v205
        %v210 = vmul.f32 %v200, %v205
        %211 = vst [vmem:[%s190] sm:$0xff] %v207
        %212 = vst [vmem:[%s190 + $0x8] sm:$0xff] %v208
        %213 = vst [vmem:[%s190 + $0x10] sm:$0xff] %v209
        %214 = vst [vmem:[%s190 + $0x18] sm:$0xff] %v210
        %s215 = sand.u32 %s95, 1
        %s216 = scalar_lea.sflag [#allocation4], %s215
        %s217 = sand.u32 %s95, 1
        %s218 = smul.addr %s217, 32
        %s219 = scalar_lea.vmem [#allocation5], %s218
        // Predicated region
        $region33: #{tpu_custom_call.1} parent=27 // pred_check
          %p220 = pneg %p105
        $region34: #{tpu_custom_call.1} parent=27 // pred_check_branch
          %222 = sbr.rel (%p220) target = $region36
        $region35: #{tpu_custom_call.1} parent=27 // pred_region
          %s223 = smul.u32 4, %s24
          %s225 = ssub.s32 512, 512
          %226 = vsyncadd %s216, %s225
          %s227 = smul.addr %s23, 8
          %s228 = sadd.s32 %s223, %s227
          %s229 = smul.addr %s228, 128
          %s230 = scalar_lea.hbm %s2, %s229
          %s232 = sshll.u32 %s219, 4
          %s233 = int_to_ptr.vmem [resolvable:$true] %s232
          %235 = dma.vmem_to_hbm [thread:$0]  %s233, 512, %s230, %s216
        $region36: #{tpu_custom_call.1} parent=27 // pred_fallthru
          _
      $region28: #{tpu_custom_call.1} parent=5 // pred_fallthru
        _
      %p236 = scmp.le.s32.totalorder 2, %s14
      // Predicated region
      $region37: #{tpu_custom_call.1} parent=5 // pred_check
        %p237 = pneg %p236
      $region38: #{tpu_custom_call.1} parent=5 // pred_check_branch
        %239 = sbr.rel (%p237) target = $region40
      $region39: #{tpu_custom_call.1} parent=5 // pred_region
        %s240 = ssub.s32 %s14, 2
        // Predicated region
        $region41: #{tpu_custom_call.1} parent=39 // pred_check
          %p241 = pneg %p111
        $region42: #{tpu_custom_call.1} parent=39 // pred_check_branch
          %243 = sbr.rel (%p241) target = $region44
        $region43: #{tpu_custom_call.1} parent=39 // pred_region
          %s244 = sand.u32 %s96, 1
          %s245 = scalar_lea.sflag [#allocation4], %s244
          %s246 = sand.u32 %s96, 1
          %s247 = smul.addr %s246, 32
          %s248 = scalar_lea.vmem [#allocation5], %s247
          %249 = dma.done %s245, 512
        $region44: #{tpu_custom_call.1} parent=39 // pred_fallthru
          _
      $region40: #{tpu_custom_call.1} parent=5 // pred_fallthru
        _
    $region6: #{tpu_custom_call.1} parent=1 // loop_footer
      %s18 = sadd.s32 1, %s14
    $region7: #{tpu_custom_call.1} parent=1 // loop_footer_branch
      %13 = sbr.rel target = $region3
    $region8: #{tpu_custom_call.1} parent=1 // loop_exit
      _
    %250 = vsyncpa [#allocation3], 1
    %s251 = scalar_lea.sflag [#allocation3], 1
    %252 = vsyncpa %s251, 1
    %253 = vsyncpa [#allocation4], 1
    %s254 = scalar_lea.sflag [#allocation4], 1
    %255 = vsyncpa %s254, 1

</llo_original>
